<compile_context>
chip_gen: v7x
topology: tpu7x:2x2x1
jax: 0.10.0
libtpu: 0.0.40
codegen_flags: <defaults>
</compile_context>

<pallas_src>
import functools

import jax
import jax.numpy as jnp
import numpy as np
from jax.experimental import pallas as pl
from jax.experimental.pallas import tpu as pltpu

BN_EPS = 1e-5
LRELU_SLOPE = 0.2


# -----------------------------------------------------------------------------
# Pallas kernels
# -----------------------------------------------------------------------------
def _conv_stats_kernel(s2d_ref, w_ref, y_ref, stats_ref, *, ho, wo):
    """Fused-im2col conv for one image of the batch.

    s2d_ref:   [Ho+1, Wo+1, 4*Cin]  bf16  (2x2 space-to-depth of padded input)
    w_ref:     [4, 4*Cin, Cout]     bf16  (2x2-equivalent weight, kpos=dh*2+dw)
    y_ref:     [Ho*Wo, Cout]        bf16  (pre-BN conv output, this image)
    stats_ref: [2, Cout]            f32   (per-image partial sum / sum-of-sq)
    """
    c4 = s2d_ref.shape[-1]
    cout = w_ref.shape[-1]
    acc = jnp.zeros((ho * wo, cout), dtype=jnp.float32)
    for dh in range(2):               # static 2x2 unroll: im2col built in VMEM
        for dw in range(2):
            v = s2d_ref[dh:dh + ho, dw:dw + wo, :]       # [Ho, Wo, 4*Cin]
            v2 = v.reshape(ho * wo, c4)                  # collapse major dims
            acc = acc + jnp.dot(v2, w_ref[dh * 2 + dw],
                                preferred_element_type=jnp.float32)
    y_ref[...] = acc.astype(y_ref.dtype)
    # Per-image partial BN stats (no cross-step read-modify-write, so the grid
    # axis can be "parallel"); two direct row stores, no concatenate.
    stats_ref[0:1, :] = jnp.sum(acc, axis=0, keepdims=True)
    stats_ref[1:2, :] = jnp.sum(acc * acc, axis=0, keepdims=True)


def _bn_lrelu_kernel(y_ref, scale_ref, bias_ref, o_ref, *, slope):
    """o = leaky_relu(y * scale + bias); math in f32 (y is stored as bf16)."""
    v = y_ref[...].astype(jnp.float32) * scale_ref[...] + bias_ref[...]
    o_ref[...] = jnp.where(v > 0, v, slope * v).astype(o_ref.dtype)


# -----------------------------------------------------------------------------
# DownBlock forward wrapper
# -----------------------------------------------------------------------------
def down_block_forward(params, x_nchw):
    """DownBlock forward: NCHW f32 in -> NCHW f32 out ([N, Cout, H/2, W/2])."""
    w = params["w"]                          # [Cout, Cin, 4, 4] spectral-normed
    gamma = params["gamma"]
    beta = params["beta"]
    cout, cin, kh_, kw_ = w.shape
    assert kh_ == 4 and kw_ == 4
    n, c, h, wd = x_nchw.shape
    assert c == cin and h % 2 == 0 and wd % 2 == 0
    ho, wo = h // 2, wd // 2
    c4 = 4 * cin

    # ---- layout glue: one input-sized pass (replaces 16x im2col blow-up) ----
    x = jnp.transpose(x_nchw, (0, 2, 3, 1)).astype(jnp.float32)       # NHWC
    xp = jnp.pad(x, ((0, 0), (1, 1), (1, 1), (0, 0)))                 # pad = 1
    s2d = (xp.reshape(n, ho + 1, 2, wo + 1, 2, cin)
             .transpose(0, 1, 3, 2, 4, 5)
             .reshape(n, ho + 1, wo + 1, c4)
             .astype(jnp.bfloat16))
    # weight reorder: w[o, c, 2*dh+di, 2*dw+dj] -> w2[dh*2+dw, (di*2+dj)*Cin+c, o]
    w2 = (jnp.transpose(w.reshape(cout, cin, 2, 2, 2, 2), (2, 4, 3, 5, 1, 0))
            .reshape(4, c4, cout)
            .astype(jnp.bfloat16))

    # ---- pass 1: conv (fused im2col) + per-image partial BN stats ----
    y_flat, stats = pl.pallas_call(
        functools.partial(_conv_stats_kernel, ho=ho, wo=wo),
        out_shape=(jax.ShapeDtypeStruct((n, ho * wo, cout), jnp.bfloat16),
                   jax.ShapeDtypeStruct((n, 2, cout), jnp.float32)),
        grid=(n,),
        in_specs=[pl.BlockSpec((None, ho + 1, wo + 1, c4),
                               lambda i: (i, 0, 0, 0)),
                  pl.BlockSpec((4, c4, cout), lambda i: (0, 0, 0))],
        out_specs=(pl.BlockSpec((None, ho * wo, cout), lambda i: (i, 0, 0)),
                   pl.BlockSpec((None, 2, cout), lambda i: (i, 0, 0))),
        compiler_params=pltpu.CompilerParams(
            dimension_semantics=("parallel",)),
    )(s2d, w2)

    # ---- reduce partial stats -> training-mode BN scale/bias (tiny, f32) ----
    m_count = n * ho * wo
    sums = jnp.sum(stats, axis=0)                    # [2, Cout]
    mean = sums[0] / m_count
    # TODO(synk): E[y^2]-E[y]^2 can cancel for large-mean activations; fine for
    # a fresh BN with zero-mean conv output, use Welford if reused elsewhere.
    var = jnp.maximum(sums[1] / m_count - mean * mean, 0.0)
    scale = gamma * jax.lax.rsqrt(var + BN_EPS)
    bias = beta - mean * scale

    # ---- pass 2: BN affine + LeakyReLU on a lane-dense slab ----
    if (wo * cout) % 128 == 0:
        rows, cols, rep = n * ho, wo * cout, wo      # lane-dense (unmasked vst)
    else:
        rows, cols, rep = n * ho * wo, cout, 1       # fallback: Cout lanes
    y2 = y_flat.reshape(rows, cols)                  # contiguous -> free reshape
    scale_t = jnp.tile(scale, rep).reshape(1, cols).astype(jnp.float32)
    bias_t = jnp.tile(bias, rep).reshape(1, cols).astype(jnp.float32)

    bytes_per_row = cols * 6                         # bf16 in + f32 out
    max_rows = max(8, (8 * 1024 * 1024) // bytes_per_row)
    if rows <= max_rows:
        tr, pad = rows, 0
    else:
        tr = max(8, (max_rows // 8) * 8)
        pad = (-rows) % tr
    y2p = jnp.pad(y2, ((0, pad), (0, 0))) if pad else y2
    rows_p = rows + pad

    out2 = pl.pallas_call(
        functools.partial(_bn_lrelu_kernel, slope=LRELU_SLOPE),
        out_shape=jax.ShapeDtypeStruct((rows_p, cols), jnp.float32),
        grid=(rows_p // tr,),
        in_specs=[pl.BlockSpec((tr, cols), lambda i: (i, 0)),
                  pl.BlockSpec((1, cols), lambda i: (0, 0)),
                  pl.BlockSpec((1, cols), lambda i: (0, 0))],
        out_specs=pl.BlockSpec((tr, cols), lambda i: (i, 0)),
        compiler_params=pltpu.CompilerParams(
            dimension_semantics=("parallel",)),
    )(y2p, scale_t, bias_t)

    out = out2[:rows].reshape(n, ho, wo, cout)
    return jnp.transpose(out, (0, 3, 1, 2))          # NHWC -> NCHW


# -----------------------------------------------------------------------------
# Parameters & plain-JAX reference (for correctness checking)
# -----------------------------------------------------------------------------
def init_down_block_params(key, in_planes, out_planes, k=4):
    """Spectral-normed conv weight (exact sigma_max of the [Cout,-1] view;
    PyTorch approximates it with power iteration) + fresh BN affine params."""
    w = 0.1 * jax.random.normal(key, (out_planes, in_planes, k, k), jnp.float32)
    wm = np.asarray(jax.device_get(w)).reshape(out_planes, -1)
    sigma = float(np.linalg.svd(wm, compute_uv=False)[0])
    return {"w": w / sigma,
            "gamma": jnp.ones((out_planes,), jnp.float32),
            "beta": jnp.zeros((out_planes,), jnp.float32)}


def reference_down_block(params, x_nchw):
    """conv(4,2,1,bias=False) -> training-mode BN -> LeakyReLU(0.2)."""
    y = jax.lax.conv_general_dilated(
        x_nchw.astype(jnp.float32), params["w"],
        window_strides=(2, 2), padding=((1, 1), (1, 1)),
        dimension_numbers=("NCHW", "OIHW", "NCHW"))
    mean = jnp.mean(y, axis=(0, 2, 3))
    var = jnp.var(y, axis=(0, 2, 3))                 # biased, as BN uses
    inv = jax.lax.rsqrt(var + BN_EPS)
    yn = (y - mean[None, :, None, None]) * inv[None, :, None, None]
    yn = yn * params["gamma"][None, :, None, None] + params["beta"][None, :, None, None]
    return jnp.where(yn > 0, yn, LRELU_SLOPE * yn)


# -----------------------------------------------------------------------------
if __name__ == "__main__":
    fwd = jax.jit(down_block_forward)

    # Case 1: DownBlock(8 -> 16) on [2, 8, 16, 16]  (lane-dense Wo*Cout = 128)
    k0, k1, k2, k3 = jax.random.split(jax.random.PRNGKey(0), 4)
    x1 = jax.random.normal(k0, (2, 8, 16, 16), jnp.float32)
    p1 = init_down_block_params(k1, 8, 16)
    o1 = fwd(p1, x1)
    jax.block_until_ready(o1)
    r1 = reference_down_block(p1, x1)
    assert o1.shape == (2, 16, 8, 8)
    assert bool(jnp.all(jnp.isfinite(o1)))
    err1 = float(jnp.max(jnp.abs(o1 - r1)))
    assert err1 < 5e-2, f"case1 max |err| = {err1}"

    # Case 2: DownBlock(4 -> 8) on [2, 4, 8, 8]  (sub-128-lane fallback path)
    x2 = jax.random.normal(k2, (2, 4, 8, 8), jnp.float32)
    p2 = init_down_block_params(k3, 4, 8)
    o2 = fwd(p2, x2)
    jax.block_until_ready(o2)
    r2 = reference_down_block(p2, x2)
    assert o2.shape == (2, 8, 4, 4)
    assert bool(jnp.all(jnp.isfinite(o2)))
    err2 = float(jnp.max(jnp.abs(o2 - r2)))
    assert err2 < 5e-2, f"case2 max |err| = {err2}"

    print("KERNEL_OK")
</pallas_src>

<mosaic_0001>
module attributes {stable_mosaic.version = 11 : i64} {
  func.func @_conv_stats_kernel(%arg0: i32, %arg1: memref<1x9x9x32xbf16, #tpu.memory_space<vmem>>, %arg2: memref<4x32x16xbf16, #tpu.memory_space<vmem>>, %arg3: memref<1x64x16xbf16, #tpu.memory_space<vmem>>, %arg4: memref<1x2x16xf32, #tpu.memory_space<vmem>>) attributes {dimension_semantics = [#tpu.dimension_semantics<parallel>], iteration_bounds = array<i64: 2>, scalar_prefetch = 0 : i64, scratch_operands = 0 : i64, tpu.core_type = #tpu.core_type<tc>, window_params = [{transform_indices = @transform_0, window_bounds = array<i64: 1, 9, 9, 32>}, {pipeline_mode = #tpu.pipeline_mode<synchronous>, transform_indices = @transform_1, window_bounds = array<i64: 4, 32, 16>}, {transform_indices = @transform_2, window_bounds = array<i64: 1, 64, 16>}, {transform_indices = @transform_3, window_bounds = array<i64: 1, 2, 16>}]} {
    %cst = arith.constant 0.000000e+00 : f32
    %0 = vector.broadcast %cst : f32 to vector<64x16xf32>
    %c0 = arith.constant 0 : index
    %c0_0 = arith.constant 0 : index
    %c0_1 = arith.constant 0 : index
    %c0_2 = arith.constant 0 : index
    %1 = vector.load %arg1[%c0, %c0_0, %c0_1, %c0_2] : memref<1x9x9x32xbf16, #tpu.memory_space<vmem>>, vector<1x8x8x32xbf16>
    %2 = vector.shape_cast %1 : vector<1x8x8x32xbf16> to vector<8x8x32xbf16>
    %3 = vector.shape_cast %2 : vector<8x8x32xbf16> to vector<64x32xbf16>
    %c0_3 = arith.constant 0 : index
    %c0_4 = arith.constant 0 : index
    %c0_5 = arith.constant 0 : index
    %4 = vector.load %arg2[%c0_3, %c0_4, %c0_5] : memref<4x32x16xbf16, #tpu.memory_space<vmem>>, vector<1x32x16xbf16>
    %5 = vector.shape_cast %4 : vector<1x32x16xbf16> to vector<32x16xbf16>
    %cst_6 = arith.constant dense<0.000000e+00> : vector<64x16xf32>
    %6 = tpu.matmul %3, %5, %cst_6 {dimension_numbers = #tpu.dot_dimension_numbers<[1], [0], [0], [1], [0, 0, 1, 1], [], []>} : vector<64x32xbf16>, vector<32x16xbf16>, vector<64x16xf32> -> vector<64x16xf32>
    %7 = arith.addf %0, %6 : vector<64x16xf32>
    %c0_7 = arith.constant 0 : index
    %c0_8 = arith.constant 0 : index
    %c1 = arith.constant 1 : index
    %c0_9 = arith.constant 0 : index
    %8 = vector.load %arg1[%c0_7, %c0_8, %c1, %c0_9] : memref<1x9x9x32xbf16, #tpu.memory_space<vmem>>, vector<1x8x8x32xbf16>
    %9 = vector.shape_cast %8 : vector<1x8x8x32xbf16> to vector<8x8x32xbf16>
    %10 = vector.shape_cast %9 : vector<8x8x32xbf16> to vector<64x32xbf16>
    %c1_10 = arith.constant 1 : index
    %c0_11 = arith.constant 0 : index
    %c0_12 = arith.constant 0 : index
    %11 = vector.load %arg2[%c1_10, %c0_11, %c0_12] : memref<4x32x16xbf16, #tpu.memory_space<vmem>>, vector<1x32x16xbf16>
    %12 = vector.shape_cast %11 : vector<1x32x16xbf16> to vector<32x16xbf16>
    %cst_13 = arith.constant dense<0.000000e+00> : vector<64x16xf32>
    %13 = tpu.matmul %10, %12, %cst_13 {dimension_numbers = #tpu.dot_dimension_numbers<[1], [0], [0], [1], [0, 0, 1, 1], [], []>} : vector<64x32xbf16>, vector<32x16xbf16>, vector<64x16xf32> -> vector<64x16xf32>
    %14 = arith.addf %7, %13 : vector<64x16xf32>
    %c0_14 = arith.constant 0 : index
    %c1_15 = arith.constant 1 : index
    %c0_16 = arith.constant 0 : index
    %c0_17 = arith.constant 0 : index
    %15 = vector.load %arg1[%c0_14, %c1_15, %c0_16, %c0_17] : memref<1x9x9x32xbf16, #tpu.memory_space<vmem>>, vector<1x8x8x32xbf16>
    %16 = vector.shape_cast %15 : vector<1x8x8x32xbf16> to vector<8x8x32xbf16>
    %17 = vector.shape_cast %16 : vector<8x8x32xbf16> to vector<64x32xbf16>
    %c2 = arith.constant 2 : index
    %c0_18 = arith.constant 0 : index
    %c0_19 = arith.constant 0 : index
    %18 = vector.load %arg2[%c2, %c0_18, %c0_19] : memref<4x32x16xbf16, #tpu.memory_space<vmem>>, vector<1x32x16xbf16>
    %19 = vector.shape_cast %18 : vector<1x32x16xbf16> to vector<32x16xbf16>
    %cst_20 = arith.constant dense<0.000000e+00> : vector<64x16xf32>
    %20 = tpu.matmul %17, %19, %cst_20 {dimension_numbers = #tpu.dot_dimension_numbers<[1], [0], [0], [1], [0, 0, 1, 1], [], []>} : vector<64x32xbf16>, vector<32x16xbf16>, vector<64x16xf32> -> vector<64x16xf32>
    %21 = arith.addf %14, %20 : vector<64x16xf32>
    %c0_21 = arith.constant 0 : index
    %c1_22 = arith.constant 1 : index
    %c1_23 = arith.constant 1 : index
    %c0_24 = arith.constant 0 : index
    %22 = vector.load %arg1[%c0_21, %c1_22, %c1_23, %c0_24] : memref<1x9x9x32xbf16, #tpu.memory_space<vmem>>, vector<1x8x8x32xbf16>
    %23 = vector.shape_cast %22 : vector<1x8x8x32xbf16> to vector<8x8x32xbf16>
    %24 = vector.shape_cast %23 : vector<8x8x32xbf16> to vector<64x32xbf16>
    %c3 = arith.constant 3 : index
    %c0_25 = arith.constant 0 : index
    %c0_26 = arith.constant 0 : index
    %25 = vector.load %arg2[%c3, %c0_25, %c0_26] : memref<4x32x16xbf16, #tpu.memory_space<vmem>>, vector<1x32x16xbf16>
    %26 = vector.shape_cast %25 : vector<1x32x16xbf16> to vector<32x16xbf16>
    %cst_27 = arith.constant dense<0.000000e+00> : vector<64x16xf32>
    %27 = tpu.matmul %24, %26, %cst_27 {dimension_numbers = #tpu.dot_dimension_numbers<[1], [0], [0], [1], [0, 0, 1, 1], [], []>} : vector<64x32xbf16>, vector<32x16xbf16>, vector<64x16xf32> -> vector<64x16xf32>
    %28 = arith.addf %21, %27 : vector<64x16xf32>
    %29 = arith.truncf %28 : vector<64x16xf32> to vector<64x16xbf16>
    %c0_28 = arith.constant 0 : index
    %c0_29 = arith.constant 0 : index
    %c0_30 = arith.constant 0 : index
    %30 = vector.load %arg3[%c0_28, %c0_29, %c0_30] : memref<1x64x16xbf16, #tpu.memory_space<vmem>>, vector<1x64x16xbf16>
    %31 = vector.shape_cast %30 : vector<1x64x16xbf16> to vector<64x16xbf16>
    %32 = vector.shape_cast %29 : vector<64x16xbf16> to vector<1x64x16xbf16>
    tpu.vector_store %arg3[%c0_28, %c0_29, %c0_30], %32 {strides = array<i32>} : memref<1x64x16xbf16, #tpu.memory_space<vmem>>, vector<1x64x16xbf16>,
    %cst_31 = arith.constant dense<0.000000e+00> : vector<16xf32>
    %33 = vector.multi_reduction <add>, %28, %cst_31 [0] : vector<64x16xf32> to vector<16xf32>
    %34 = vector.shape_cast %33 : vector<16xf32> to vector<1x16xf32>
    %c0_32 = arith.constant 0 : index
    %c0_33 = arith.constant 0 : index
    %c0_34 = arith.constant 0 : index
    %35 = vector.load %arg4[%c0_32, %c0_33, %c0_34] : memref<1x2x16xf32, #tpu.memory_space<vmem>>, vector<1x1x16xf32>
    %36 = vector.shape_cast %35 : vector<1x1x16xf32> to vector<1x16xf32>
    %37 = vector.shape_cast %34 : vector<1x16xf32> to vector<1x1x16xf32>
    tpu.vector_store %arg4[%c0_32, %c0_33, %c0_34], %37 {strides = array<i32>} : memref<1x2x16xf32, #tpu.memory_space<vmem>>, vector<1x1x16xf32>,
    %38 = arith.mulf %28, %28 : vector<64x16xf32>
    %cst_35 = arith.constant dense<0.000000e+00> : vector<16xf32>
    %39 = vector.multi_reduction <add>, %38, %cst_35 [0] : vector<64x16xf32> to vector<16xf32>
    %40 = vector.shape_cast %39 : vector<16xf32> to vector<1x16xf32>
    %c0_36 = arith.constant 0 : index
    %c1_37 = arith.constant 1 : index
    %c0_38 = arith.constant 0 : index
    %41 = vector.load %arg4[%c0_36, %c1_37, %c0_38] : memref<1x2x16xf32, #tpu.memory_space<vmem>>, vector<1x1x16xf32>
    %42 = vector.shape_cast %41 : vector<1x1x16xf32> to vector<1x16xf32>
    %43 = vector.shape_cast %40 : vector<1x16xf32> to vector<1x1x16xf32>
    tpu.vector_store %arg4[%c0_36, %c1_37, %c0_38], %43 {strides = array<i32>} : memref<1x2x16xf32, #tpu.memory_space<vmem>>, vector<1x1x16xf32>,
    return
  }
  func.func @transform_0(%arg0: i32) -> (i32, i32, i32, i32) {
    %c0_i32 = arith.constant 0 : i32
    %c0_i32_0 = arith.constant 0 : i32
    %c0_i32_1 = arith.constant 0 : i32
    %c0_i32_2 = arith.constant 0 : i32
    return %arg0, %c0_i32, %c0_i32_0, %c0_i32_1 : i32, i32, i32, i32
  }
  func.func @transform_1(%arg0: i32) -> (i32, i32, i32) {
    %c0_i32 = arith.constant 0 : i32
    %c0_i32_0 = arith.constant 0 : i32
    %c0_i32_1 = arith.constant 0 : i32
    %c0_i32_2 = arith.constant 0 : i32
    return %c0_i32, %c0_i32_0, %c0_i32_1 : i32, i32, i32
  }
  func.func @transform_2(%arg0: i32) -> (i32, i32, i32) {
    %c0_i32 = arith.constant 0 : i32
    %c0_i32_0 = arith.constant 0 : i32
    %c0_i32_1 = arith.constant 0 : i32
    return %arg0, %c0_i32, %c0_i32_0 : i32, i32, i32
  }
  func.func @transform_3(%arg0: i32) -> (i32, i32, i32) {
    %c0_i32 = arith.constant 0 : i32
    %c0_i32_0 = arith.constant 0 : i32
    %c0_i32_1 = arith.constant 0 : i32
    return %arg0, %c0_i32, %c0_i32_0 : i32, i32, i32
  }
}

module attributes {stable_mosaic.version = 11 : i64} {
  func.func @_bn_lrelu_kernel(%arg0: i32, %arg1: memref<16x128xbf16, #tpu.memory_space<vmem>>, %arg2: memref<1x128xf32, #tpu.memory_space<vmem>>, %arg3: memref<1x128xf32, #tpu.memory_space<vmem>>, %arg4: memref<16x128xf32, #tpu.memory_space<vmem>>) attributes {dimension_semantics = [#tpu.dimension_semantics<parallel>], iteration_bounds = array<i64: 1>, scalar_prefetch = 0 : i64, scratch_operands = 0 : i64, tpu.core_type = #tpu.core_type<tc>, window_params = [{transform_indices = @transform_0, window_bounds = array<i64: 16, 128>}, {pipeline_mode = #tpu.pipeline_mode<synchronous>, transform_indices = @transform_1, window_bounds = array<i64: 1, 128>}, {pipeline_mode = #tpu.pipeline_mode<synchronous>, transform_indices = @transform_2, window_bounds = array<i64: 1, 128>}, {transform_indices = @transform_3, window_bounds = array<i64: 16, 128>}]} {
    %c0 = arith.constant 0 : index
    %c0_0 = arith.constant 0 : index
    %0 = vector.load %arg1[%c0, %c0_0] : memref<16x128xbf16, #tpu.memory_space<vmem>>, vector<16x128xbf16>
    %1 = arith.extf %0 : vector<16x128xbf16> to vector<16x128xf32>
    %c0_1 = arith.constant 0 : index
    %c0_2 = arith.constant 0 : index
    %2 = vector.load %arg2[%c0_1, %c0_2] : memref<1x128xf32, #tpu.memory_space<vmem>>, vector<1x128xf32>
    %3 = vector.broadcast %2 : vector<1x128xf32> to vector<16x128xf32>
    %4 = arith.mulf %1, %3 : vector<16x128xf32>
    %c0_3 = arith.constant 0 : index
    %c0_4 = arith.constant 0 : index
    %5 = vector.load %arg3[%c0_3, %c0_4] : memref<1x128xf32, #tpu.memory_space<vmem>>, vector<1x128xf32>
    %6 = vector.broadcast %5 : vector<1x128xf32> to vector<16x128xf32>
    %7 = arith.addf %4, %6 : vector<16x128xf32>
    %cst = arith.constant 0.000000e+00 : f32
    %8 = vector.broadcast %cst : f32 to vector<16x128xf32>
    %9 = arith.cmpf ogt, %7, %8 : vector<16x128xf32>
    %cst_5 = arith.constant 2.000000e-01 : f32
    %10 = vector.broadcast %cst_5 : f32 to vector<16x128xf32>
    %11 = arith.mulf %10, %7 : vector<16x128xf32>
    %12 = arith.select %9, %7, %11 : vector<16x128xi1>, vector<16x128xf32>
    %c0_6 = arith.constant 0 : index
    %c0_7 = arith.constant 0 : index
    %13 = vector.load %arg4[%c0_6, %c0_7] : memref<16x128xf32, #tpu.memory_space<vmem>>, vector<16x128xf32>
    tpu.vector_store %arg4[%c0_6, %c0_7], %12 {strides = array<i32>} : memref<16x128xf32, #tpu.memory_space<vmem>>, vector<16x128xf32>,
    return
  }
  func.func @transform_0(%arg0: i32) -> (i32, i32) {
    %c0_i32 = arith.constant 0 : i32
    %c0_i32_0 = arith.constant 0 : i32
    return %arg0, %c0_i32 : i32, i32
  }
  func.func @transform_1(%arg0: i32) -> (i32, i32) {
    %c0_i32 = arith.constant 0 : i32
    %c0_i32_0 = arith.constant 0 : i32
    %c0_i32_1 = arith.constant 0 : i32
    return %c0_i32, %c0_i32_0 : i32, i32
  }
  func.func @transform_2(%arg0: i32) -> (i32, i32) {
    %c0_i32 = arith.constant 0 : i32
    %c0_i32_0 = arith.constant 0 : i32
    %c0_i32_1 = arith.constant 0 : i32
    return %c0_i32, %c0_i32_0 : i32, i32
  }
  func.func @transform_3(%arg0: i32) -> (i32, i32) {
    %c0_i32 = arith.constant 0 : i32
    %c0_i32_0 = arith.constant 0 : i32
    return %arg0, %c0_i32 : i32, i32
  }
}

</mosaic_0001>

<llo_original>
// kernel: tile.13
$region0: #{tile.13}
  #allocation0 [shape = 's32[1]{0}', space=sflag, size = 0x4, scoped, tag = 'scoped memory for tile.13']
  %s0 = inlined_call_operand.vmem [shape: f32[16], index: 0, kind: input, shape index: {}]
  %s1 = inlined_call_operand.vmem [shape: f32[8,16], index: 1, kind: output, shape index: {}]
  // Predicated region
  $region2: #{tile.13} parent=0 // pred_check
    _
  $region3: #{tile.13} parent=0 // pred_check_branch
    %3 = sbr.rel (0) target = $region5
  $region4: #{tile.13} parent=0 // pred_region
    _
  $region5: #{tile.13} parent=0 // pred_fallthru
    _
  %v4 = vld [vmem:[%s0] ss:$0 sm:$0xff]
  %5 = vst [vmem:[%s1] sm:$0xff] %v4

// kernel: tile.14
$region0: #{tile.14}
  %s0 = inlined_call_operand.vmem [shape: f32[8,16], index: 0, kind: input, shape index: {}]
  %s1 = inlined_call_operand.vmem [shape: f32[1,128], index: 1, kind: output, shape index: {}]
  $region1: #{tile.14} parent=0
    #allocation0 [shape = 'u8[4096]{0}', space=vmem, size = 0x1000, scoped, tag = 'scoped mem for output reshape']
    %v2 = vld [vmem:[%s0] sm:$0x1]
    %vm3 = vcmask 130048
    %4 = vst.msk [vmem:[#allocation0] sm:$0x1] %vm3, %v2
    %s5 = scalar_lea.vmem %s0, 7
    %v6 = vld [vmem:[%s5] sm:$0x1]
    %7 = vrot.lane.b32.xlu0 %v6, 112
    %v8 = vpop.permute.xlu0 %7
    %vm9 = vcmask 1048448
    %10 = vst.msk [vmem:[#allocation0] sm:$0x1] %vm9, %v8
    %s11 = scalar_lea.vmem %s0, 6
    %v12 = vld [vmem:[%s11] sm:$0x1]
    %13 = vrot.lane.b32.xlu0 %v12, 96
    %v14 = vpop.permute.xlu0 %13
    %vm15 = vcmask 917248
    %16 = vst.msk [vmem:[#allocation0] sm:$0x1] %vm15, %v14
    %s17 = scalar_lea.vmem %s0, 5
    %v18 = vld [vmem:[%s17] sm:$0x1]
    %19 = vrot.lane.b32.xlu0 %v18, 80
    %v20 = vpop.permute.xlu0 %19
    %vm21 = vcmask 786048
    %22 = vst.msk [vmem:[#allocation0] sm:$0x1] %vm21, %v20
    %s23 = scalar_lea.vmem %s0, 4
    %v24 = vld [vmem:[%s23] sm:$0x1]
    %25 = vrot.lane.b32.xlu0 %v24, 64
    %v26 = vpop.permute.xlu0 %25
    %vm27 = vcmask 654848
    %28 = vst.msk [vmem:[#allocation0] sm:$0x1] %vm27, %v26
    %s29 = scalar_lea.vmem %s0, 3
    %v30 = vld [vmem:[%s29] sm:$0x1]
    %31 = vrot.lane.b32.xlu0 %v30, 48
    %v32 = vpop.permute.xlu0 %31
    %vm33 = vcmask 523648
    %34 = vst.msk [vmem:[#allocation0] sm:$0x1] %vm33, %v32
    %s35 = scalar_lea.vmem %s0, 2
    %v36 = vld [vmem:[%s35] sm:$0x1]
    %37 = vrot.lane.b32.xlu0 %v36, 32
    %v38 = vpop.permute.xlu0 %37
    %vm39 = vcmask 392448
    %40 = vst.msk [vmem:[#allocation0] sm:$0x1] %vm39, %v38
    %s41 = scalar_lea.vmem %s0, 1
    %v42 = vld [vmem:[%s41] sm:$0x1]
    %43 = vrot.lane.b32.xlu0 %v42, 16
    %v44 = vpop.permute.xlu0 %43
    %vm45 = vcmask 261248
    %46 = vst.msk [vmem:[#allocation0] sm:$0x1] %vm45, %v44
    %s48 = sshllo.u32 0, 1
    %v50 = vld [vmem:[#allocation0] sm:%s48]
    %s51 = sshllo.u32 0, 1
    %52 = vst [vmem:[%s1] sm:%s51] %v50

// kernel: down_block_forward.3
$region0: #{down_block_forward.3}
  #allocation0 [shape = 'u32[]', space=smem, size = 0x4, offset = 0x4, fixed_abs, tag = 'smem constant byte address 0x4 - core index']
  #allocation1 [shape = 'u32[144,128]{1,0:T(1,128)}', space=vmem, size = 0x12000, scoped, tag = 'internal scratch']
  %s0 = inlined_call_operand.vmem [shape: bf16[16,128], index: 0, kind: input, shape index: {}]
  %s1 = inlined_call_operand.vmem [shape: f32[1,128], index: 1, kind: input, shape index: {}]
  %s2 = inlined_call_operand.vmem [shape: f32[1,128], index: 2, kind: input, shape index: {}]
  %s3 = inlined_call_operand.vmem [shape: f32[16,128], index: 3, kind: output, shape index: {}]
  %s4 = sld [smem:[#allocation0]]
  $region22: #{down_block_forward.3} parent=0
    _
  %s6 = ssub.s32 1, %s4
  %s7 = scalar_select 0, %s6, %s4
  // Predicated region
  $region2: #{down_block_forward.3} parent=0 // pred_check
    _
  $region3: #{down_block_forward.3} parent=0 // pred_check_branch
    %9 = sbr.rel (0) target = $region5
  $region4: #{down_block_forward.3} parent=0 // pred_region
    _
  $region5: #{down_block_forward.3} parent=0 // pred_fallthru
    _
  // Predicated region
  $region6: #{down_block_forward.3} parent=0 // pred_check
    _
  $region7: #{down_block_forward.3} parent=0 // pred_check_branch
    %11 = sbr.rel (0) target = $region9
  $region8: #{down_block_forward.3} parent=0 // pred_region
    _
  $region9: #{down_block_forward.3} parent=0 // pred_fallthru
    _
  // Predicated region
  $region10: #{down_block_forward.3} parent=0 // pred_check
    _
  $region11: #{down_block_forward.3} parent=0 // pred_check_branch
    %13 = sbr.rel (0) target = $region13
  $region12: #{down_block_forward.3} parent=0 // pred_region
    _
  $region13: #{down_block_forward.3} parent=0 // pred_fallthru
    _
  %v14 = vld [vmem:[%s0] sm:$0xf]
  %v15 = vld [vmem:[%s0 + $0x4] sm:$0xf]
  %v16 = vunpack.c.l.bf16 %v14
  %v17 = vunpack.c.l.bf16 %v15
  %v18 = vld [vmem:[%s1] sm:$0x1]
  %v20 = vlaneseq
  %v21 = vshrl.u32 %v20, 7
  %v22 = vsub.s32 0, %v21
  %v23 = vrot.slane %v18, %v22
  %v25 = vmul.f32 %v16, %v23
  %v26 = vmul.f32 %v17, %v23
  %v27 = vld [vmem:[%s2] sm:$0x1]
  %v29 = vlaneseq
  %v30 = vshrl.u32 %v29, 7
  %v31 = vsub.s32 0, %v30
  %v32 = vrot.slane %v27, %v31
  %v34 = vadd.f32 %v25, %v32
  %v35 = vadd.f32 %v26, %v32
  %vm36 = vcmp.gt.f32.partialorder %v34, 0.0
  %vm37 = vcmp.gt.f32.partialorder %v35, 0.0
  %v38 = vmul.f32 %v34, 0.2
  %v39 = vmul.f32 %v35, 0.2
  %v40 = vsel %vm36, %v34, %v38
  %v41 = vsel %vm37, %v35, %v39
  %42 = vst [vmem:[%s3] sm:$0xff] %v40
  %43 = vst [vmem:[%s3 + $0x8] sm:$0xff] %v41
  // Predicated region
  $region14: #{down_block_forward.3} parent=0 // pred_check
    _
  $region15: #{down_block_forward.3} parent=0 // pred_check_branch
    %45 = sbr.rel (0) target = $region17
  $region16: #{down_block_forward.3} parent=0 // pred_region
    _
  $region17: #{down_block_forward.3} parent=0 // pred_fallthru
    _
  // Predicated region
  $region18: #{down_block_forward.3} parent=0 // pred_check
    _
  $region19: #{down_block_forward.3} parent=0 // pred_check_branch
    %47 = sbr.rel (0) target = $region21
  $region20: #{down_block_forward.3} parent=0 // pred_region
    _
  $region21: #{down_block_forward.3} parent=0 // pred_fallthru
    _

// kernel: down_block_forward.2
$region0: #{down_block_forward.2}
  #allocation0 [shape = 'u32[]', space=smem, size = 0x4, offset = 0x4, fixed_abs, tag = 'smem constant byte address 0x4 - core index']
  #allocation1 [shape = 'u32[144,128]{1,0:T(1,128)}', space=vmem, size = 0x12000, scoped, tag = 'internal scratch']
  %s0 = inlined_call_operand.vmem [shape: bf16[2,9,9,32], index: 0, kind: input, shape index: {}]
  %s1 = inlined_call_operand.vmem [shape: bf16[4,32,16], index: 1, kind: input, shape index: {}]
  %s2 = inlined_call_operand.vmem [shape: bf16[2,64,16], index: 2, kind: output, shape index: {0}]
  %s3 = inlined_call_operand.vmem [shape: f32[2,2,16], index: 3, kind: output, shape index: {1}]
  %4 = xla_tuple %s2, %s3
  %s5 = sld [smem:[#allocation0]]
  $region49: #{down_block_forward.2} parent=0
    _
  %s7 = ssub.s32 1, %s5
  %s8 = scalar_select 0, %s7, %s5
  loop: start=0, step=1, limit=4
  $region2: #{down_block_forward.2} parent=0 // loop_pre_header
    _
  $region3: #{down_block_forward.2} parent=0 // loop_header
    %s10 = sphi 0, %s14
    %p11 = scmp.ge.s32.totalorder %s10, 4
    %s20 = sphi 0, %s22
    %s23 = sphi 0, %s20
    %s24 = sphi 0, %s23
    %s40 = sphi 0, %s24
    %s44 = sphi 0, %s44
    %s46 = sphi 0, %s44
    %s47 = sphi 0, %s46
    %s61 = sphi 0, %s47
    %s67 = sphi 0, %s69
    %s70 = sphi 0, %s67
    %s71 = sphi 0, %s70
    %s87 = sphi 0, %s71
    %s93 = sphi 0, %s95
    %s96 = sphi 0, %s93
    %s97 = sphi 0, %s96
    %s113 = sphi 0, %s97
  $region4: #{down_block_forward.2} parent=0 // loop_header_branch
    %13 = sbr.rel (%p11) target = $region8
  $region5: #{down_block_forward.2} parent=0 // loop_body
    %s15 = ssub.s32 %s10, 1
    %s16 = ssub.s32 %s10, 2
    %s17 = sadd.s32 %s10, 1
    %s18 = ssub.s32 %s10, %s17
    %p19 = scmp.eq.s32.totalorder %s18, 0
    %s21 = sadd.s32 %s20, 1
    %s22 = scalar_select %p19, %s20, %s21
    %p25 = pneg %p19
    %p26 = scmp.eq.s32.totalorder %s10, 1
    %p27 = por %p25, %p26
    %p28 = scmp.ne.s32.totalorder %s20, %s23
    %p29 = scmp.eq.s32.totalorder %s10, 0
    %p30 = por %p28, %p29
    %p31 = scmp.ne.s32.totalorder %s20, %s23
    %p32 = scmp.eq.s32.totalorder %s15, 1
    %p33 = por %p31, %p32
    %p34 = scmp.ne.s32.totalorder %s23, %s24
    %p35 = scmp.eq.s32.totalorder %s15, 0
    %p36 = por %p34, %p35
    %p37 = scmp.ne.s32.totalorder %s23, %s24
    %p38 = scmp.eq.s32.totalorder %s16, 1
    %p39 = por %p37, %p38
    %p41 = scmp.ne.s32.totalorder %s24, %s40
    %p42 = scmp.eq.s32.totalorder %s16, 0
    %p43 = por %p41, %p42
    %s45 = sadd.s32 %s44, 1
    %p48 = scmp.eq.s32.totalorder %s10, 1
    %p49 = scmp.ne.s32.totalorder %s44, %s46
    %p50 = scmp.eq.s32.totalorder %s10, 0
    %p51 = por %p49, %p50
    %p52 = scmp.ne.s32.totalorder %s44, %s46
    %p53 = scmp.eq.s32.totalorder %s15, 1
    %p54 = por %p52, %p53
    %p55 = scmp.ne.s32.totalorder %s46, %s47
    %p56 = scmp.eq.s32.totalorder %s15, 0
    %p57 = por %p55, %p56
    %p58 = scmp.ne.s32.totalorder %s46, %s47
    %p59 = scmp.eq.s32.totalorder %s16, 1
    %p60 = por %p58, %p59
    %p62 = scmp.ne.s32.totalorder %s47, %s61
    %p63 = scmp.eq.s32.totalorder %s16, 0
    %p64 = por %p62, %p63
    %s65 = ssub.s32 %s10, %s17
    %p66 = scmp.eq.s32.totalorder %s65, 0
    %s68 = sadd.s32 %s67, 1
    %s69 = scalar_select %p66, %s67, %s68
    %p72 = pneg %p66
    %p73 = scmp.eq.s32.totalorder %s10, 1
    %p74 = por %p72, %p73
    %p75 = scmp.ne.s32.totalorder %s67, %s70
    %p76 = scmp.eq.s32.totalorder %s10, 0
    %p77 = por %p75, %p76
    %p78 = scmp.ne.s32.totalorder %s67, %s70
    %p79 = scmp.eq.s32.totalorder %s15, 1
    %p80 = por %p78, %p79
    %p81 = scmp.ne.s32.totalorder %s70, %s71
    %p82 = scmp.eq.s32.totalorder %s15, 0
    %p83 = por %p81, %p82
    %p84 = scmp.ne.s32.totalorder %s70, %s71
    %p85 = scmp.eq.s32.totalorder %s16, 1
    %p86 = por %p84, %p85
    %p88 = scmp.ne.s32.totalorder %s71, %s87
    %p89 = scmp.eq.s32.totalorder %s16, 0
    %p90 = por %p88, %p89
    %s91 = ssub.s32 %s10, %s17
    %p92 = scmp.eq.s32.totalorder %s91, 0
    %s94 = sadd.s32 %s93, 1
    %s95 = scalar_select %p92, %s93, %s94
    %p98 = pneg %p92
    %p99 = scmp.eq.s32.totalorder %s10, 1
    %p100 = por %p98, %p99
    %p101 = scmp.ne.s32.totalorder %s93, %s96
    %p102 = scmp.eq.s32.totalorder %s10, 0
    %p103 = por %p101, %p102
    %p104 = scmp.ne.s32.totalorder %s93, %s96
    %p105 = scmp.eq.s32.totalorder %s15, 1
    %p106 = por %p104, %p105
    %p107 = scmp.ne.s32.totalorder %s96, %s97
    %p108 = scmp.eq.s32.totalorder %s15, 0
    %p109 = por %p107, %p108
    %p110 = scmp.ne.s32.totalorder %s96, %s97
    %p111 = scmp.eq.s32.totalorder %s16, 1
    %p112 = por %p110, %p111
    %p114 = scmp.ne.s32.totalorder %s97, %s113
    %p115 = scmp.eq.s32.totalorder %s16, 0
    %p116 = por %p114, %p115
    %p117 = scmp.le.s32.totalorder 1, %s10
    %p118 = scmp.lt.s32.totalorder %s10, 3
    %p119 = pnand %p117, %p118
    %p120 = pneg %p119
    // Predicated region
    $region9: #{down_block_forward.2} parent=5 // pred_check
      _
    $region10: #{down_block_forward.2} parent=5 // pred_check_branch
      %122 = sbr.rel (%p119) target = $region12
    $region11: #{down_block_forward.2} parent=5 // pred_region
      %s123 = ssub.s32 %s10, 1
      // Predicated region
      $region13: #{down_block_forward.2} parent=11 // pred_check
        %p124 = pneg %p57
      $region14: #{down_block_forward.2} parent=11 // pred_check_branch
        %126 = sbr.rel (%p124) target = $region16
      $region15: #{down_block_forward.2} parent=11 // pred_region
        _
      $region16: #{down_block_forward.2} parent=11 // pred_fallthru
        _
    $region12: #{down_block_forward.2} parent=5 // pred_fallthru
      _
    %p127 = scmp.lt.s32.totalorder %s10, 2
    // Predicated region
    $region17: #{down_block_forward.2} parent=5 // pred_check
      %p128 = pneg %p127
    $region18: #{down_block_forward.2} parent=5 // pred_check_branch
      %130 = sbr.rel (%p128) target = $region20
    $region19: #{down_block_forward.2} parent=5 // pred_region
      // Predicated region
      $region21: #{down_block_forward.2} parent=19 // pred_check
        %p131 = pneg %p30
      $region22: #{down_block_forward.2} parent=19 // pred_check_branch
        %133 = sbr.rel (%p131) target = $region24
      $region23: #{down_block_forward.2} parent=19 // pred_region
        %p134 = scmp.lt.s32.totalorder %s10, 1
        %s135 = scalar_select %p134, %s10, 1
        %s136 = smul.addr %s135, 18
        %s137 = smul.addr %s136, 4
        %s138 = scalar_lea.vmem %s0, %s137
      $region24: #{down_block_forward.2} parent=19 // pred_fallthru
        _
    $region20: #{down_block_forward.2} parent=5 // pred_fallthru
      _
    %p139 = scmp.le.s32.totalorder 1, %s10
    %p140 = scmp.lt.s32.totalorder %s10, 3
    %p141 = pnand %p139, %p140
    %p142 = pneg %p141
    // Predicated region
    $region25: #{down_block_forward.2} parent=5 // pred_check
      _
    $region26: #{down_block_forward.2} parent=5 // pred_check_branch
      %144 = sbr.rel (%p141) target = $region28
    $region27: #{down_block_forward.2} parent=5 // pred_region
      %s145 = ssub.s32 %s10, 1
      %p146 = scmp.lt.s32.totalorder %s15, 1
      %s147 = scalar_select %p146, %s15, 1
      %s148 = smul.addr %s147, 18
      %s149 = smul.addr %s148, 4
      %s150 = scalar_lea.vmem %s0, %s149
      %p151 = pneg %p36
      %p152 = pneg %p33
      %p153 = pneg %p57
      %p154 = pneg %p54
      %p155 = pneg %p83
      %p156 = pneg %p80
      %p157 = scmp.lt.s32.totalorder %s15, 1
      %s158 = scalar_select %p157, %s15, 1
      %s159 = smul.addr %s158, 8
      %s160 = smul.addr %s159, 4
      %s161 = scalar_lea.vmem %s2, %s160
      %p162 = pneg %p109
      %p163 = pneg %p106
      %p164 = scmp.lt.s32.totalorder %s15, 1
      %s165 = scalar_select %p164, %s15, 1
      %s166 = smul.addr %s165, 2
      %s167 = scalar_lea.vmem %s3, %s166
      %p168 = scmp.lt.s32.totalorder %s15, 1
      %s169 = scalar_select %p168, %s15, 1
      %s170 = smul.addr %s169, 18
      %s171 = smul.addr %s170, 4
      %s172 = scalar_lea.vmem %s0, %s171
      %p173 = scmp.lt.s32.totalorder %s15, 1
      %s174 = scalar_select %p173, %s15, 1
      %s175 = smul.addr %s174, 8
      %s176 = smul.addr %s175, 4
      %s177 = scalar_lea.vmem %s2, %s176
      %p178 = scmp.lt.s32.totalorder %s15, 1
      %s179 = scalar_select %p178, %s15, 1
      %s180 = smul.addr %s179, 2
      %s181 = scalar_lea.vmem %s3, %s180
      %v183 = vld [vmem:[%s172] sm:$0xf]
      %v184 = vld [vmem:[%s172 + $0x8] sm:$0xf]
      %v185 = vld [vmem:[%s172 + $0x10] sm:$0xf]
      %v186 = vld [vmem:[%s172 + $0x18] sm:$0xf]
      %v187 = vld [vmem:[%s172 + $0x20] sm:$0xf]
      %v188 = vld [vmem:[%s172 + $0x28] sm:$0xf]
      %v189 = vld [vmem:[%s172 + $0x30] sm:$0xf]
      %v190 = vld [vmem:[%s172 + $0x38] sm:$0xf]
      %v191 = vld [vmem:[%s1] sm:$0xf]
      %v192 = vld [vmem:[%s1 + $0x4] sm:$0xf]
      %v193 = vld [vmem:[%s1 + $0x8] sm:$0xf]
      %v194 = vld [vmem:[%s1 + $0xc] sm:$0xf]
      %v195 = vld [vmem:[%s172 + $0x4] sm:$0x1]
      %v196 = vld [vmem:[%s172 + $0xc] sm:$0x1]
      %v197 = vld [vmem:[%s172 + $0x14] sm:$0x1]
      %v198 = vld [vmem:[%s172 + $0x1c] sm:$0x1]
      %v199 = vld [vmem:[%s172 + $0x24] sm:$0x1]
      %v200 = vld [vmem:[%s172 + $0x2c] sm:$0x1]
      %v201 = vld [vmem:[%s172 + $0x34] sm:$0x1]
      %v202 = vld [vmem:[%s172 + $0x3c] sm:$0x1]
      %vm203 = vsmask.f32 3328
      %vm204 = vsmask.f32 7440
      %vm205 = vmor %vm203, %vm204
      %v207 = vshrl.u32 %v183, 16
      %v209 = vrot.slane %v207, 4
      %v210 = vshll.u32 %v183, 16
      %v212 = vrot.slane %v210, 5
      %v213 = vor.u32 %v209, %v212
      %v214 = vrot.slane %v213, 4
      %v216 = vshll.u32 %v195, 16
      %v218 = vrot.slane %v216, 5
      %v219 = vsel %vm205, %v214, %v218
      %v221 = vshrl.u32 %v184, 16
      %v223 = vrot.slane %v221, 4
      %v224 = vshll.u32 %v184, 16
      %v226 = vrot.slane %v224, 5
      %v227 = vor.u32 %v223, %v226
      %v228 = vrot.slane %v227, 4
      %v230 = vshll.u32 %v196, 16
      %v232 = vrot.slane %v230, 5
      %v233 = vsel %vm205, %v228, %v232
      %v235 = vshrl.u32 %v185, 16
      %v237 = vrot.slane %v235, 4
      %v238 = vshll.u32 %v185, 16
      %v240 = vrot.slane %v238, 5
      %v241 = vor.u32 %v237, %v240
      %v242 = vrot.slane %v241, 4
      %v244 = vshll.u32 %v197, 16
      %v246 = vrot.slane %v244, 5
      %v247 = vsel %vm205, %v242, %v246
      %v249 = vshrl.u32 %v186, 16
      %v251 = vrot.slane %v249, 4
      %v252 = vshll.u32 %v186, 16
      %v254 = vrot.slane %v252, 5
      %v255 = vor.u32 %v251, %v254
      %v256 = vrot.slane %v255, 4
      %v258 = vshll.u32 %v198, 16
      %v260 = vrot.slane %v258, 5
      %v261 = vsel %vm205, %v256, %v260
      %v263 = vshrl.u32 %v187, 16
      %v265 = vrot.slane %v263, 4
      %v266 = vshll.u32 %v187, 16
      %v268 = vrot.slane %v266, 5
      %v269 = vor.u32 %v265, %v268
      %v270 = vrot.slane %v269, 4
      %v272 = vshll.u32 %v199, 16
      %v274 = vrot.slane %v272, 5
      %v275 = vsel %vm205, %v270, %v274
      %v277 = vshrl.u32 %v188, 16
      %v279 = vrot.slane %v277, 4
      %v280 = vshll.u32 %v188, 16
      %v282 = vrot.slane %v280, 5
      %v283 = vor.u32 %v279, %v282
      %v284 = vrot.slane %v283, 4
      %v286 = vshll.u32 %v200, 16
      %v288 = vrot.slane %v286, 5
      %v289 = vsel %vm205, %v284, %v288
      %v291 = vshrl.u32 %v189, 16
      %v293 = vrot.slane %v291, 4
      %v294 = vshll.u32 %v189, 16
      %v296 = vrot.slane %v294, 5
      %v297 = vor.u32 %v293, %v296
      %v298 = vrot.slane %v297, 4
      %v300 = vshll.u32 %v201, 16
      %v302 = vrot.slane %v300, 5
      %v303 = vsel %vm205, %v298, %v302
      %v305 = vshrl.u32 %v190, 16
      %v307 = vrot.slane %v305, 4
      %v308 = vshll.u32 %v190, 16
      %v310 = vrot.slane %v308, 5
      %v311 = vor.u32 %v307, %v310
      %v312 = vrot.slane %v311, 4
      %v314 = vshll.u32 %v202, 16
      %v316 = vrot.slane %v314, 5
      %v317 = vsel %vm205, %v312, %v316
      %s318 = scalar_lea.vmem %s1, 16
      %v319 = vld [vmem:[%s318] sm:$0xf]
      %v320 = vld [vmem:[%s318 + $0x4] sm:$0xf]
      %v321 = vld [vmem:[%s318 + $0x8] sm:$0xf]
      %v322 = vld [vmem:[%s318 + $0xc] sm:$0xf]
      %v323 = vunpack.c.l.b16 %v219
      %v324 = vunpack.c.l.b16 %v233
      %v325 = vunpack.c.l.b16 %v247
      %v326 = vunpack.c.l.b16 %v261
      %v327 = vunpack.c.l.b16 %v275
      %v328 = vunpack.c.l.b16 %v289
      %v329 = vunpack.c.l.b16 %v303
      %v330 = vunpack.c.l.b16 %v317
      %v331 = vpack.c.b16 %v324, %v323
      %v332 = vpack.c.b16 %v326, %v325
      %v333 = vpack.c.b16 %v328, %v327
      %v334 = vpack.c.b16 %v330, %v329
      %v339 = vunpack.c.l.b16 %v319
      %v340 = vunpack.c.l.b16 %v320
      %v341 = vunpack.c.l.b16 %v321
      %v342 = vunpack.c.l.b16 %v322
      %v343 = vpack.c.b16 %v340, %v339
      %v344 = vpack.c.b16 %v342, %v341
      %vm347 = vcmask 261120
      %v349 = vsel %vm347, %v331, 0
      %v352 = vsel %vm347, %v332, 0
      %v355 = vsel %vm347, %v333, 0
      %v358 = vsel %vm347, %v334, 0
      %360 = vmatprep.subr.bf16.mxu0 0
      %361 = vmatpush1.bf16.msra.mxu0 %v343
      %362 = vmatprep.subr.bf16.mxu0 0
      %363 = vmatpush1.bf16.msra.mxu0 %v344
      %364 = vmatprep.subr.bf16.mxu0 0
      %365 = vmatpush1.bf16.msra.mxu0 0
      %366 = vmatprep.subr.bf16.mxu0 0
      %367 = vmatpush1.bf16.msra.mxu0 0
      %368 = vmatprep.subr.bf16.mxu0 0
      %369 = vmatpush1.bf16.msra.mxu0 0
      %370 = vmatprep.subr.bf16.mxu0 0
      %371 = vmatpush1.bf16.msra.mxu0 0
      %372 = vmatprep.subr.bf16.mxu0 0
      %373 = vmatpush1.bf16.msra.mxu0 0
      %374 = vmatprep.subr.bf16.mxu0 0
      %375 = vmatpush1.bf16.msra.mxu0 0
      %376 = vmatprep.subr.bf16.mxu0 0
      %377 = vmatpush1.bf16.msra.mxu0 0
      %378 = vmatprep.subr.bf16.mxu0 0
      %379 = vmatpush1.bf16.msra.mxu0 0
      %380 = vmatprep.subr.bf16.mxu0 0
      %381 = vmatpush1.bf16.msra.mxu0 0
      %382 = vmatprep.subr.bf16.mxu0 0
      %383 = vmatpush1.bf16.msra.mxu0 0
      %384 = vmatprep.subr.bf16.mxu0 0
      %385 = vmatpush1.bf16.msra.mxu0 0
      %386 = vmatprep.subr.bf16.mxu0 0
      %387 = vmatpush1.bf16.msra.mxu0 0
      %388 = vmatprep.subr.bf16.mxu0 0
      %389 = vmatpush1.bf16.msra.mxu0 0
      %390 = vmatprep.subr.bf16.mxu0 0
      %391 = vmatpush1.bf16.msra.mxu0 0
      %392 = vmatprep.mubr.bf16.mxu0 0
      %393 = vmatmul.mubr.bf16.gmra.mrb[0].mxu0 %v349
      %v394 = vpop.f32.mrb[0].mxu0
      %v395 = vadd.f32 0.0, %v394
      %v396 = vpop.f32.mrb[0].mxu0
      %v397 = vpop.f32.mrb[0].mxu0
      %v398 = vadd.f32 0.0, %v397
      %v399 = vpop.f32.mrb[0].mxu0
      %400 = vmatprep.mubr.bf16.mxu0 0
      %401 = vmatmul.mubr.bf16.gmra.mrb[0].mxu0 %v352
      %v402 = vpop.f32.mrb[0].mxu0
      %v403 = vadd.f32 0.0, %v402
      %v404 = vpop.f32.mrb[0].mxu0
      %v405 = vpop.f32.mrb[0].mxu0
      %v406 = vadd.f32 0.0, %v405
      %v407 = vpop.f32.mrb[0].mxu0
      %408 = vmatprep.mubr.bf16.mxu0 0
      %409 = vmatmul.mubr.bf16.gmra.mrb[0].mxu0 %v355
      %v410 = vpop.f32.mrb[0].mxu0
      %v411 = vadd.f32 0.0, %v410
      %v412 = vpop.f32.mrb[0].mxu0
      %v413 = vpop.f32.mrb[0].mxu0
      %v414 = vadd.f32 0.0, %v413
      %v415 = vpop.f32.mrb[0].mxu0
      %416 = vmatprep.mubr.bf16.mxu0 0
      %417 = vmatmul.mubr.bf16.gmra.mrb[0].mxu0 %v358
      %v418 = vpop.f32.mrb[0].mxu0
      %v419 = vadd.f32 0.0, %v418
      %v420 = vpop.f32.mrb[0].mxu0
      %v421 = vpop.f32.mrb[0].mxu0
      %v422 = vadd.f32 0.0, %v421
      %v423 = vpop.f32.mrb[0].mxu0
      %424 = vdwg.mxu0
      %v433 = vunpack.c.l.b16 %v183
      %v434 = vunpack.c.l.b16 %v184
      %v435 = vunpack.c.l.b16 %v185
      %v436 = vunpack.c.l.b16 %v186
      %v437 = vunpack.c.l.b16 %v187
      %v438 = vunpack.c.l.b16 %v188
      %v439 = vunpack.c.l.b16 %v189
      %v440 = vunpack.c.l.b16 %v190
      %v441 = vpack.c.b16 %v434, %v433
      %v442 = vpack.c.b16 %v436, %v435
      %v443 = vpack.c.b16 %v438, %v437
      %v444 = vpack.c.b16 %v440, %v439
      %v449 = vunpack.c.l.b16 %v191
      %v450 = vunpack.c.l.b16 %v192
      %v451 = vunpack.c.l.b16 %v193
      %v452 = vunpack.c.l.b16 %v194
      %v453 = vpack.c.b16 %v450, %v449
      %v454 = vpack.c.b16 %v452, %v451
      %v458 = vsel %vm347, %v441, 0
      %v461 = vsel %vm347, %v442, 0
      %v464 = vsel %vm347, %v443, 0
      %v467 = vsel %vm347, %v444, 0
      %469 = vmatprep.subr.bf16.mxu0 0
      %470 = vmatpush1.bf16.msra.mxu0 %v453
      %471 = vmatprep.subr.bf16.mxu0 0
      %472 = vmatpush1.bf16.msra.mxu0 %v454
      %473 = vmatprep.subr.bf16.mxu0 0
      %474 = vmatpush1.bf16.msra.mxu0 0
      %475 = vmatprep.subr.bf16.mxu0 0
      %476 = vmatpush1.bf16.msra.mxu0 0
      %477 = vmatprep.subr.bf16.mxu0 0
      %478 = vmatpush1.bf16.msra.mxu0 0
      %479 = vmatprep.subr.bf16.mxu0 0
      %480 = vmatpush1.bf16.msra.mxu0 0
      %481 = vmatprep.subr.bf16.mxu0 0
      %482 = vmatpush1.bf16.msra.mxu0 0
      %483 = vmatprep.subr.bf16.mxu0 0
      %484 = vmatpush1.bf16.msra.mxu0 0
      %485 = vmatprep.subr.bf16.mxu0 0
      %486 = vmatpush1.bf16.msra.mxu0 0
      %487 = vmatprep.subr.bf16.mxu0 0
      %488 = vmatpush1.bf16.msra.mxu0 0
      %489 = vmatprep.subr.bf16.mxu0 0
      %490 = vmatpush1.bf16.msra.mxu0 0
      %491 = vmatprep.subr.bf16.mxu0 0
      %492 = vmatpush1.bf16.msra.mxu0 0
      %493 = vmatprep.subr.bf16.mxu0 0
      %494 = vmatpush1.bf16.msra.mxu0 0
      %495 = vmatprep.subr.bf16.mxu0 0
      %496 = vmatpush1.bf16.msra.mxu0 0
      %497 = vmatprep.subr.bf16.mxu0 0
      %498 = vmatpush1.bf16.msra.mxu0 0
      %499 = vmatprep.subr.bf16.mxu0 0
      %500 = vmatpush1.bf16.msra.mxu0 0
      %501 = vmatprep.mubr.bf16.mxu0 0
      %502 = vmatmul.mubr.bf16.gmra.mrb[0].mxu0 %v458
      %v503 = vpop.f32.mrb[0].mxu0
      %v504 = vadd.f32 %v395, %v503
      %v505 = vpop.f32.mrb[0].mxu0
      %v506 = vpop.f32.mrb[0].mxu0
      %v507 = vadd.f32 %v398, %v506
      %v508 = vpop.f32.mrb[0].mxu0
      %509 = vmatprep.mubr.bf16.mxu0 0
      %510 = vmatmul.mubr.bf16.gmra.mrb[0].mxu0 %v461
      %v511 = vpop.f32.mrb[0].mxu0
      %v512 = vadd.f32 %v403, %v511
      %v513 = vpop.f32.mrb[0].mxu0
      %v514 = vpop.f32.mrb[0].mxu0
      %v515 = vadd.f32 %v406, %v514
      %v516 = vpop.f32.mrb[0].mxu0
      %517 = vmatprep.mubr.bf16.mxu0 0
      %518 = vmatmul.mubr.bf16.gmra.mrb[0].mxu0 %v464
      %v519 = vpop.f32.mrb[0].mxu0
      %v520 = vadd.f32 %v411, %v519
      %v521 = vpop.f32.mrb[0].mxu0
      %v522 = vpop.f32.mrb[0].mxu0
      %v523 = vadd.f32 %v414, %v522
      %v524 = vpop.f32.mrb[0].mxu0
      %525 = vmatprep.mubr.bf16.mxu0 0
      %526 = vmatmul.mubr.bf16.gmra.mrb[0].mxu0 %v467
      %v527 = vpop.f32.mrb[0].mxu0
      %v528 = vadd.f32 %v419, %v527
      %v529 = vpop.f32.mrb[0].mxu0
      %v530 = vpop.f32.mrb[0].mxu0
      %v531 = vadd.f32 %v422, %v530
      %v532 = vpop.f32.mrb[0].mxu0
      %533 = vdwg.mxu0
      %s534 = scalar_lea.vmem %s172, 8
      %v535 = vld [vmem:[%s534] sm:$0xf]
      %v536 = vld [vmem:[%s534 + $0x8] sm:$0xf]
      %v537 = vld [vmem:[%s534 + $0x10] sm:$0xf]
      %v538 = vld [vmem:[%s534 + $0x18] sm:$0xf]
      %v539 = vld [vmem:[%s534 + $0x20] sm:$0xf]
      %v540 = vld [vmem:[%s534 + $0x28] sm:$0xf]
      %v541 = vld [vmem:[%s534 + $0x30] sm:$0xf]
      %v542 = vld [vmem:[%s534 + $0x38] sm:$0xf]
      %s543 = scalar_lea.vmem %s1, 32
      %v544 = vld [vmem:[%s543] sm:$0xf]
      %v545 = vld [vmem:[%s543 + $0x4] sm:$0xf]
      %v546 = vld [vmem:[%s543 + $0x8] sm:$0xf]
      %v547 = vld [vmem:[%s543 + $0xc] sm:$0xf]
      %v556 = vunpack.c.l.b16 %v535
      %v557 = vunpack.c.l.b16 %v536
      %v558 = vunpack.c.l.b16 %v537
      %v559 = vunpack.c.l.b16 %v538
      %v560 = vunpack.c.l.b16 %v539
      %v561 = vunpack.c.l.b16 %v540
      %v562 = vunpack.c.l.b16 %v541
      %v563 = vunpack.c.l.b16 %v542
      %v564 = vpack.c.b16 %v557, %v556
      %v565 = vpack.c.b16 %v559, %v558
      %v566 = vpack.c.b16 %v561, %v560
      %v567 = vpack.c.b16 %v563, %v562
      %v572 = vunpack.c.l.b16 %v544
      %v573 = vunpack.c.l.b16 %v545
      %v574 = vunpack.c.l.b16 %v546
      %v575 = vunpack.c.l.b16 %v547
      %v576 = vpack.c.b16 %v573, %v572
      %v577 = vpack.c.b16 %v575, %v574
      %v581 = vsel %vm347, %v564, 0
      %v584 = vsel %vm347, %v565, 0
      %v587 = vsel %vm347, %v566, 0
      %v590 = vsel %vm347, %v567, 0
      %592 = vmatprep.subr.bf16.mxu0 0
      %593 = vmatpush1.bf16.msra.mxu0 %v576
      %594 = vmatprep.subr.bf16.mxu0 0
      %595 = vmatpush1.bf16.msra.mxu0 %v577
      %596 = vmatprep.subr.bf16.mxu0 0
      %597 = vmatpush1.bf16.msra.mxu0 0
      %598 = vmatprep.subr.bf16.mxu0 0
      %599 = vmatpush1.bf16.msra.mxu0 0
      %600 = vmatprep.subr.bf16.mxu0 0
      %601 = vmatpush1.bf16.msra.mxu0 0
      %602 = vmatprep.subr.bf16.mxu0 0
      %603 = vmatpush1.bf16.msra.mxu0 0
      %604 = vmatprep.subr.bf16.mxu0 0
      %605 = vmatpush1.bf16.msra.mxu0 0
      %606 = vmatprep.subr.bf16.mxu0 0
      %607 = vmatpush1.bf16.msra.mxu0 0
      %608 = vmatprep.subr.bf16.mxu0 0
      %609 = vmatpush1.bf16.msra.mxu0 0
      %610 = vmatprep.subr.bf16.mxu0 0
      %611 = vmatpush1.bf16.msra.mxu0 0
      %612 = vmatprep.subr.bf16.mxu0 0
      %613 = vmatpush1.bf16.msra.mxu0 0
      %614 = vmatprep.subr.bf16.mxu0 0
      %615 = vmatpush1.bf16.msra.mxu0 0
      %616 = vmatprep.subr.bf16.mxu0 0
      %617 = vmatpush1.bf16.msra.mxu0 0
      %618 = vmatprep.subr.bf16.mxu0 0
      %619 = vmatpush1.bf16.msra.mxu0 0
      %620 = vmatprep.subr.bf16.mxu0 0
      %621 = vmatpush1.bf16.msra.mxu0 0
      %622 = vmatprep.subr.bf16.mxu0 0
      %623 = vmatpush1.bf16.msra.mxu0 0
      %624 = vmatprep.mubr.bf16.mxu0 0
      %625 = vmatmul.mubr.bf16.gmra.mrb[0].mxu0 %v581
      %v626 = vpop.f32.mrb[0].mxu0
      %v627 = vadd.f32 0.0, %v626
      %v628 = vpop.f32.mrb[0].mxu0
      %v629 = vpop.f32.mrb[0].mxu0
      %v630 = vadd.f32 0.0, %v629
      %v631 = vpop.f32.mrb[0].mxu0
      %632 = vmatprep.mubr.bf16.mxu0 0
      %633 = vmatmul.mubr.bf16.gmra.mrb[0].mxu0 %v584
      %v634 = vpop.f32.mrb[0].mxu0
      %v635 = vadd.f32 0.0, %v634
      %v636 = vpop.f32.mrb[0].mxu0
      %v637 = vpop.f32.mrb[0].mxu0
      %v638 = vadd.f32 0.0, %v637
      %v639 = vpop.f32.mrb[0].mxu0
      %640 = vmatprep.mubr.bf16.mxu0 0
      %641 = vmatmul.mubr.bf16.gmra.mrb[0].mxu0 %v587
      %v642 = vpop.f32.mrb[0].mxu0
      %v643 = vadd.f32 0.0, %v642
      %v644 = vpop.f32.mrb[0].mxu0
      %v645 = vpop.f32.mrb[0].mxu0
      %v646 = vadd.f32 0.0, %v645
      %v647 = vpop.f32.mrb[0].mxu0
      %648 = vmatprep.mubr.bf16.mxu0 0
      %649 = vmatmul.mubr.bf16.gmra.mrb[0].mxu0 %v590
      %v650 = vpop.f32.mrb[0].mxu0
      %v651 = vadd.f32 0.0, %v650
      %v652 = vpop.f32.mrb[0].mxu0
      %v653 = vpop.f32.mrb[0].mxu0
      %v654 = vadd.f32 0.0, %v653
      %v655 = vpop.f32.mrb[0].mxu0
      %656 = vdwg.mxu0
      %v657 = vadd.f32 %v504, %v627
      %v658 = vadd.f32 %v507, %v630
      %v659 = vadd.f32 %v512, %v635
      %v660 = vadd.f32 %v515, %v638
      %v661 = vadd.f32 %v520, %v643
      %v662 = vadd.f32 %v523, %v646
      %v663 = vadd.f32 %v528, %v651
      %v664 = vadd.f32 %v531, %v654
      %v665 = vld [vmem:[%s534] sm:$0xf]
      %v666 = vld [vmem:[%s534 + $0x4] sm:$0x1]
      %v667 = vld [vmem:[%s534 + $0x8] sm:$0xf]
      %v668 = vld [vmem:[%s534 + $0xc] sm:$0x1]
      %v669 = vld [vmem:[%s534 + $0x10] sm:$0xf]
      %v670 = vld [vmem:[%s534 + $0x14] sm:$0x1]
      %v671 = vld [vmem:[%s534 + $0x18] sm:$0xf]
      %v672 = vld [vmem:[%s534 + $0x1c] sm:$0x1]
      %v673 = vld [vmem:[%s534 + $0x20] sm:$0xf]
      %v674 = vld [vmem:[%s534 + $0x24] sm:$0x1]
      %v675 = vld [vmem:[%s534 + $0x28] sm:$0xf]
      %v676 = vld [vmem:[%s534 + $0x2c] sm:$0x1]
      %v677 = vld [vmem:[%s534 + $0x30] sm:$0xf]
      %v678 = vld [vmem:[%s534 + $0x34] sm:$0x1]
      %v679 = vld [vmem:[%s534 + $0x38] sm:$0xf]
      %v680 = vld [vmem:[%s534 + $0x3c] sm:$0x1]
      %v682 = vshrl.u32 %v665, 16
      %v684 = vrot.slane %v682, 4
      %v685 = vshll.u32 %v665, 16
      %v687 = vrot.slane %v685, 5
      %v688 = vor.u32 %v684, %v687
      %v689 = vrot.slane %v688, 4
      %v691 = vshll.u32 %v666, 16
      %v693 = vrot.slane %v691, 5
      %v694 = vsel %vm205, %v689, %v693
      %v696 = vshrl.u32 %v667, 16
      %v698 = vrot.slane %v696, 4
      %v699 = vshll.u32 %v667, 16
      %v701 = vrot.slane %v699, 5
      %v702 = vor.u32 %v698, %v701
      %v703 = vrot.slane %v702, 4
      %v705 = vshll.u32 %v668, 16
      %v707 = vrot.slane %v705, 5
      %v708 = vsel %vm205, %v703, %v707
      %v710 = vshrl.u32 %v669, 16
      %v712 = vrot.slane %v710, 4
      %v713 = vshll.u32 %v669, 16
      %v715 = vrot.slane %v713, 5
      %v716 = vor.u32 %v712, %v715
      %v717 = vrot.slane %v716, 4
      %v719 = vshll.u32 %v670, 16
      %v721 = vrot.slane %v719, 5
      %v722 = vsel %vm205, %v717, %v721
      %v724 = vshrl.u32 %v671, 16
      %v726 = vrot.slane %v724, 4
      %v727 = vshll.u32 %v671, 16
      %v729 = vrot.slane %v727, 5
      %v730 = vor.u32 %v726, %v729
      %v731 = vrot.slane %v730, 4
      %v733 = vshll.u32 %v672, 16
      %v735 = vrot.slane %v733, 5
      %v736 = vsel %vm205, %v731, %v735
      %v738 = vshrl.u32 %v673, 16
      %v740 = vrot.slane %v738, 4
      %v741 = vshll.u32 %v673, 16
      %v743 = vrot.slane %v741, 5
      %v744 = vor.u32 %v740, %v743
      %v745 = vrot.slane %v744, 4
      %v747 = vshll.u32 %v674, 16
      %v749 = vrot.slane %v747, 5
      %v750 = vsel %vm205, %v745, %v749
      %v752 = vshrl.u32 %v675, 16
      %v754 = vrot.slane %v752, 4
      %v755 = vshll.u32 %v675, 16
      %v757 = vrot.slane %v755, 5
      %v758 = vor.u32 %v754, %v757
      %v759 = vrot.slane %v758, 4
      %v761 = vshll.u32 %v676, 16
      %v763 = vrot.slane %v761, 5
      %v764 = vsel %vm205, %v759, %v763
      %v766 = vshrl.u32 %v677, 16
      %v768 = vrot.slane %v766, 4
      %v769 = vshll.u32 %v677, 16
      %v771 = vrot.slane %v769, 5
      %v772 = vor.u32 %v768, %v771
      %v773 = vrot.slane %v772, 4
      %v775 = vshll.u32 %v678, 16
      %v777 = vrot.slane %v775, 5
      %v778 = vsel %vm205, %v773, %v777
      %v780 = vshrl.u32 %v679, 16
      %v782 = vrot.slane %v780, 4
      %v783 = vshll.u32 %v679, 16
      %v785 = vrot.slane %v783, 5
      %v786 = vor.u32 %v782, %v785
      %v787 = vrot.slane %v786, 4
      %v789 = vshll.u32 %v680, 16
      %v791 = vrot.slane %v789, 5
      %v792 = vsel %vm205, %v787, %v791
      %s793 = scalar_lea.vmem %s1, 48
      %v794 = vld [vmem:[%s793] sm:$0xf]
      %v795 = vld [vmem:[%s793 + $0x4] sm:$0xf]
      %v796 = vld [vmem:[%s793 + $0x8] sm:$0xf]
      %v797 = vld [vmem:[%s793 + $0xc] sm:$0xf]
      %v798 = vunpack.c.l.b16 %v694
      %v799 = vunpack.c.l.b16 %v708
      %v800 = vunpack.c.l.b16 %v722
      %v801 = vunpack.c.l.b16 %v736
      %v802 = vunpack.c.l.b16 %v750
      %v803 = vunpack.c.l.b16 %v764
      %v804 = vunpack.c.l.b16 %v778
      %v805 = vunpack.c.l.b16 %v792
      %v806 = vpack.c.b16 %v799, %v798
      %v807 = vpack.c.b16 %v801, %v800
      %v808 = vpack.c.b16 %v803, %v802
      %v809 = vpack.c.b16 %v805, %v804
      %v814 = vunpack.c.l.b16 %v794
      %v815 = vunpack.c.l.b16 %v795
      %v816 = vunpack.c.l.b16 %v796
      %v817 = vunpack.c.l.b16 %v797
      %v818 = vpack.c.b16 %v815, %v814
      %v819 = vpack.c.b16 %v817, %v816
      %v823 = vsel %vm347, %v806, 0
      %v826 = vsel %vm347, %v807, 0
      %v829 = vsel %vm347, %v808, 0
      %v832 = vsel %vm347, %v809, 0
      %834 = vmatprep.subr.bf16.mxu0 0
      %835 = vmatpush1.bf16.msra.mxu0 %v818
      %836 = vmatprep.subr.bf16.mxu0 0
      %837 = vmatpush1.bf16.msra.mxu0 %v819
      %838 = vmatprep.subr.bf16.mxu0 0
      %839 = vmatpush1.bf16.msra.mxu0 0
      %840 = vmatprep.subr.bf16.mxu0 0
      %841 = vmatpush1.bf16.msra.mxu0 0
      %842 = vmatprep.subr.bf16.mxu0 0
      %843 = vmatpush1.bf16.msra.mxu0 0
      %844 = vmatprep.subr.bf16.mxu0 0
      %845 = vmatpush1.bf16.msra.mxu0 0
      %846 = vmatprep.subr.bf16.mxu0 0
      %847 = vmatpush1.bf16.msra.mxu0 0
      %848 = vmatprep.subr.bf16.mxu0 0
      %849 = vmatpush1.bf16.msra.mxu0 0
      %850 = vmatprep.subr.bf16.mxu0 0
      %851 = vmatpush1.bf16.msra.mxu0 0
      %852 = vmatprep.subr.bf16.mxu0 0
      %853 = vmatpush1.bf16.msra.mxu0 0
      %854 = vmatprep.subr.bf16.mxu0 0
      %855 = vmatpush1.bf16.msra.mxu0 0
      %856 = vmatprep.subr.bf16.mxu0 0
      %857 = vmatpush1.bf16.msra.mxu0 0
      %858 = vmatprep.subr.bf16.mxu0 0
      %859 = vmatpush1.bf16.msra.mxu0 0
      %860 = vmatprep.subr.bf16.mxu0 0
      %861 = vmatpush1.bf16.msra.mxu0 0
      %862 = vmatprep.subr.bf16.mxu0 0
      %863 = vmatpush1.bf16.msra.mxu0 0
      %864 = vmatprep.subr.bf16.mxu0 0
      %865 = vmatpush1.bf16.msra.mxu0 0
      %866 = vmatprep.mubr.bf16.mxu0 0
      %867 = vmatmul.mubr.bf16.gmra.mrb[0].mxu0 %v823
      %v868 = vpop.f32.mrb[0].mxu0
      %v869 = vadd.f32 0.0, %v868
      %v870 = vpop.f32.mrb[0].mxu0
      %v871 = vpop.f32.mrb[0].mxu0
      %v872 = vadd.f32 0.0, %v871
      %v873 = vpop.f32.mrb[0].mxu0
      %874 = vmatprep.mubr.bf16.mxu0 0
      %875 = vmatmul.mubr.bf16.gmra.mrb[0].mxu0 %v826
      %v876 = vpop.f32.mrb[0].mxu0
      %v877 = vadd.f32 0.0, %v876
      %v878 = vpop.f32.mrb[0].mxu0
      %v879 = vpop.f32.mrb[0].mxu0
      %v880 = vadd.f32 0.0, %v879
      %v881 = vpop.f32.mrb[0].mxu0
      %882 = vmatprep.mubr.bf16.mxu0 0
      %883 = vmatmul.mubr.bf16.gmra.mrb[0].mxu0 %v829
      %v884 = vpop.f32.mrb[0].mxu0
      %v885 = vadd.f32 0.0, %v884
      %v886 = vpop.f32.mrb[0].mxu0
      %v887 = vpop.f32.mrb[0].mxu0
      %v888 = vadd.f32 0.0, %v887
      %v889 = vpop.f32.mrb[0].mxu0
      %890 = vmatprep.mubr.bf16.mxu0 0
      %891 = vmatmul.mubr.bf16.gmra.mrb[0].mxu0 %v832
      %v892 = vpop.f32.mrb[0].mxu0
      %v893 = vadd.f32 0.0, %v892
      %v894 = vpop.f32.mrb[0].mxu0
      %v895 = vpop.f32.mrb[0].mxu0
      %v896 = vadd.f32 0.0, %v895
      %v897 = vpop.f32.mrb[0].mxu0
      %898 = vdwg.mxu0
      %v899 = vadd.f32 %v657, %v869
      %v900 = vadd.f32 %v658, %v872
      %v901 = vadd.f32 %v659, %v877
      %v902 = vadd.f32 %v660, %v880
      %v903 = vadd.f32 %v661, %v885
      %v904 = vadd.f32 %v662, %v888
      %v905 = vadd.f32 %v663, %v893
      %v906 = vadd.f32 %v664, %v896
      %v907 = vpack.c.bf16 %v900, %v899
      %v908 = vpack.c.bf16 %v902, %v901
      %v909 = vpack.c.bf16 %v904, %v903
      %v910 = vpack.c.bf16 %v906, %v905
      %v915 = vunpack.c.l.b16 %v907
      %v916 = vunpack.c.h.b16 %v907
      %v917 = vunpack.c.l.b16 %v908
      %v918 = vunpack.c.h.b16 %v908
      %v919 = vunpack.c.l.b16 %v909
      %v920 = vunpack.c.h.b16 %v909
      %v921 = vunpack.c.l.b16 %v910
      %v922 = vunpack.c.h.b16 %v910
      %v923 = vpack.c.b16 %v915, %v915
      %v924 = vpack.c.b16 %v916, %v916
      %v925 = vpack.c.b16 %v917, %v917
      %v926 = vpack.c.b16 %v918, %v918
      %v927 = vpack.c.b16 %v919, %v919
      %v928 = vpack.c.b16 %v920, %v920
      %v929 = vpack.c.b16 %v921, %v921
      %v930 = vpack.c.b16 %v922, %v922
      %vm939 = vcmask 125952
      %940 = vst.msk [vmem:[%s177] sm:$0xf] %vm939, %v923
      %941 = vst.msk [vmem:[%s177 + $0x4] sm:$0xf] %vm939, %v924
      %942 = vst.msk [vmem:[%s177 + $0x8] sm:$0xf] %vm939, %v925
      %943 = vst.msk [vmem:[%s177 + $0xc] sm:$0xf] %vm939, %v926
      %944 = vst.msk [vmem:[%s177 + $0x10] sm:$0xf] %vm939, %v927
      %945 = vst.msk [vmem:[%s177 + $0x14] sm:$0xf] %vm939, %v928
      %946 = vst.msk [vmem:[%s177 + $0x18] sm:$0xf] %vm939, %v929
      %947 = vst.msk [vmem:[%s177 + $0x1c] sm:$0xf] %vm939, %v930
      %vm948 = vcmask 130048
      %v949 = vsel %vm948, %v899, 0.0
      %v950 = vsel %vm948, %v900, 0.0
      %v951 = vadd.f32 %v949, %v950
      %v952 = vsel %vm948, %v901, 0.0
      %v953 = vadd.f32 %v951, %v952
      %v954 = vsel %vm948, %v902, 0.0
      %v955 = vadd.f32 %v953, %v954
      %v956 = vsel %vm948, %v903, 0.0
      %v957 = vadd.f32 %v955, %v956
      %v958 = vsel %vm948, %v904, 0.0
      %v959 = vadd.f32 %v957, %v958
      %v960 = vsel %vm948, %v905, 0.0
      %v961 = vadd.f32 %v959, %v960
      %v962 = vsel %vm948, %v906, 0.0
      %v963 = vadd.f32 %v961, %v962
      %v964 = vrot.slane %v963, 4
      %v965 = vadd.f32 %v963, %v964
      %v966 = vrot.slane %v965, 2
      %v967 = vadd.f32 %v965, %v966
      %v968 = vrot.slane %v967, 1
      %v969 = vadd.f32 %v967, %v968
      %vm970 = vcmask 122880
      %971 = vst.msk [vmem:[%s181] sm:$0x1] %vm970, %v969
      %v972 = vmul.f32 %v899, %v899
      %v973 = vmul.f32 %v900, %v900
      %v974 = vmul.f32 %v901, %v901
      %v975 = vmul.f32 %v902, %v902
      %v976 = vmul.f32 %v903, %v903
      %v977 = vmul.f32 %v904, %v904
      %v978 = vmul.f32 %v905, %v905
      %v979 = vmul.f32 %v906, %v906
      %v980 = vsel %vm948, %v972, 0.0
      %v981 = vsel %vm948, %v973, 0.0
      %v982 = vadd.f32 %v980, %v981
      %v983 = vsel %vm948, %v974, 0.0
      %v984 = vadd.f32 %v982, %v983
      %v985 = vsel %vm948, %v975, 0.0
      %v986 = vadd.f32 %v984, %v985
      %v987 = vsel %vm948, %v976, 0.0
      %v988 = vadd.f32 %v986, %v987
      %v989 = vsel %vm948, %v977, 0.0
      %v990 = vadd.f32 %v988, %v989
      %v991 = vsel %vm948, %v978, 0.0
      %v992 = vadd.f32 %v990, %v991
      %v993 = vsel %vm948, %v979, 0.0
      %v994 = vadd.f32 %v992, %v993
      %v995 = vrot.slane %v994, 4
      %v996 = vadd.f32 %v994, %v995
      %v997 = vrot.slane %v996, 2
      %v998 = vadd.f32 %v996, %v997
      %v999 = vrot.slane %v998, 1
      %v1000 = vadd.f32 %v998, %v999
      %1001 = vst.msk [vmem:[%s181 + $0x1] sm:$0x1] %vm970, %v1000
      %p1002 = scmp.lt.s32.totalorder %s15, 1
      %s1003 = scalar_select %p1002, %s15, 1
      %s1004 = smul.addr %s1003, 8
      %s1005 = smul.addr %s1004, 4
      %s1006 = scalar_lea.vmem %s2, %s1005
      %p1007 = scmp.lt.s32.totalorder %s15, 1
      %s1008 = scalar_select %p1007, %s15, 1
      %s1009 = smul.addr %s1008, 2
      %s1010 = scalar_lea.vmem %s3, %s1009
      // Predicated region
      $region29: #{down_block_forward.2} parent=27 // pred_check
        %p1011 = pneg %p80
      $region30: #{down_block_forward.2} parent=27 // pred_check_branch
        %1013 = sbr.rel (%p1011) target = $region32
      $region31: #{down_block_forward.2} parent=27 // pred_region
        _
      $region32: #{down_block_forward.2} parent=27 // pred_fallthru
        _
      // Predicated region
      $region33: #{down_block_forward.2} parent=27 // pred_check
        %p1014 = pneg %p106
      $region34: #{down_block_forward.2} parent=27 // pred_check_branch
        %1016 = sbr.rel (%p1014) target = $region36
      $region35: #{down_block_forward.2} parent=27 // pred_region
        _
      $region36: #{down_block_forward.2} parent=27 // pred_fallthru
        _
    $region28: #{down_block_forward.2} parent=5 // pred_fallthru
      _
    %p1017 = scmp.le.s32.totalorder 2, %s10
    // Predicated region
    $region37: #{down_block_forward.2} parent=5 // pred_check
      %p1018 = pneg %p1017
    $region38: #{down_block_forward.2} parent=5 // pred_check_branch
      %1020 = sbr.rel (%p1018) target = $region40
    $region39: #{down_block_forward.2} parent=5 // pred_region
      %s1021 = ssub.s32 %s10, 2
      // Predicated region
      $region41: #{down_block_forward.2} parent=39 // pred_check
        %p1022 = pneg %p86
      $region42: #{down_block_forward.2} parent=39 // pred_check_branch
        %1024 = sbr.rel (%p1022) target = $region44
      $region43: #{down_block_forward.2} parent=39 // pred_region
        %p1025 = scmp.lt.s32.totalorder %s16, 1
        %s1026 = scalar_select %p1025, %s16, 1
        %s1027 = smul.addr %s1026, 8
        %s1028 = smul.addr %s1027, 4
        %s1029 = scalar_lea.vmem %s2, %s1028
      $region44: #{down_block_forward.2} parent=39 // pred_fallthru
        _
      // Predicated region
      $region45: #{down_block_forward.2} parent=39 // pred_check
        %p1030 = pneg %p112
      $region46: #{down_block_forward.2} parent=39 // pred_check_branch
        %1032 = sbr.rel (%p1030) target = $region48
      $region47: #{down_block_forward.2} parent=39 // pred_region
        %p1033 = scmp.lt.s32.totalorder %s16, 1
        %s1034 = scalar_select %p1033, %s16, 1
        %s1035 = smul.addr %s1034, 2
        %s1036 = scalar_lea.vmem %s3, %s1035
      $region48: #{down_block_forward.2} parent=39 // pred_fallthru
        _
    $region40: #{down_block_forward.2} parent=5 // pred_fallthru
      _
  $region6: #{down_block_forward.2} parent=0 // loop_footer
    %s14 = sadd.s32 1, %s10
  $region7: #{down_block_forward.2} parent=0 // loop_footer_branch
    %9 = sbr.rel target = $region3
  $region8: #{down_block_forward.2} parent=0 // loop_exit
    _

</llo_original>
